<compile_context>
chip_gen: v7x
topology: tpu7x:2x2x1
jax: 0.10.0
libtpu: 0.0.40
codegen_flags: <defaults>
</compile_context>

<pallas_src>
import warnings

import jax
import jax.numpy as jnp
from jax.experimental import pallas as pl
from jax.experimental.pallas import tpu as pltpu


def _relu_kernel(x_ref, o_ref):
    # Elementwise ReLU on the whole VMEM tile (VPU op); 0 promotes to ref dtype.
    o_ref[...] = jnp.maximum(x_ref[...], 0)


# Per-operand size below which a single grid-less full-array VMEM block is used.
# in + out = 2x this must fit v5e's 16 MiB scoped-VMEM default -> 6 MiB/operand.
_SINGLE_BLOCK_BYTES = 6 * 1024 * 1024
# ~2 MiB tiles for the tiled fallback: amortizes the ~0.35 us/step grid overhead
# to <10% while 4 buffers (double-buffered in+out) stay ~8 MiB, v5e-safe.
_TILE_BYTES = 2 * 1024 * 1024
_LANE = 128


def _packed_sublanes(dtype) -> int:
    """Native packed sublane tile height: 8 (f32), 16 (bf16/f16), 32 (int8/fp8)."""
    itemsize = jnp.dtype(dtype).itemsize
    return max(8, 8 * (4 // max(itemsize, 1)))


def _as_2d(x: jax.Array) -> jax.Array:
    """Flatten to (rows, cols) with rows the largest power of two <= the dtype's
    packed sublane count that divides the total element count (no padding copy)."""
    total = x.size
    r = _packed_sublanes(x.dtype)
    while r > 1 and total % r != 0:
        r //= 2
    return x.reshape(r, total // r)


def _choose_cols(total: int):
    """Largest lane-dense (multiple of 128) column width dividing `total`."""
    for c in (65536, 32768, 16384, 8192, 4096, 2048, 1024, 512, 256, 128):
        if total % c == 0:
            return c
    return None


def relu_pallas(x: jax.Array) -> jax.Array:
    """ReLU over an arbitrary-shape tensor (NCHW for this module)."""
    orig_shape = x.shape
    total = x.size
    itemsize = jnp.dtype(x.dtype).itemsize
    nbytes = total * itemsize
    cost = pl.CostEstimate(flops=total, transcendentals=0, bytes_accessed=2 * nbytes)

    if nbytes <= _SINGLE_BLOCK_BYTES:
        # Small activation: one grid-less call, whole array resident in VMEM.
        x2d = _as_2d(x)
        out2d = pl.pallas_call(
            _relu_kernel,
            out_shape=jax.ShapeDtypeStruct(x2d.shape, x2d.dtype),
            in_specs=[pl.BlockSpec(memory_space=pltpu.MemorySpace.VMEM)],
            out_specs=pl.BlockSpec(memory_space=pltpu.MemorySpace.VMEM),
            input_output_aliases={0: 0},  # in-place ReLU when donated
            cost_estimate=cost,
        )(x2d)
        return out2d.reshape(orig_shape)

    packed = _packed_sublanes(x.dtype)
    cols = _choose_cols(total)
    if cols is not None:
        # Row-axis tiling of a (R, lane-dense C) view: every block is a single
        # contiguous HBM region and stays fully sublane-dense for any dtype.
        rows = total // cols
        tile_r = max(packed, (_TILE_BYTES // (cols * itemsize)) // packed * packed)
        tile_r = min(tile_r, rows)
        tile_bytes = tile_r * cols * itemsize
        grid = (pl.cdiv(rows, tile_r),)
        block = (tile_r, cols)
        index_map = lambda i: (i, 0)
        x2d = x.reshape(rows, cols)
    else:
        # Ragged total: column-tile a (rows, total/rows) slab. Account for
        # sublane padding (a (rows<packed, C) block occupies `packed` sublanes).
        x2d = _as_2d(x)
        rows, cols2 = x2d.shape
        padded_rows = max(rows, packed)
        tile_c = max(_LANE, (_TILE_BYTES // (padded_rows * itemsize)) // _LANE * _LANE)
        tile_c = min(tile_c, cols2)
        tile_bytes = padded_rows * tile_c * itemsize
        grid = (pl.cdiv(cols2, tile_c),)
        block = (rows, tile_c)
        index_map = lambda j: (0, j)

    # Double-buffered in + out (+ headroom); >=16 MiB is fine on every
    # generation, cap well under v7x's 64 MiB physical VMEM.
    vmem_limit = min(48 * 1024 * 1024,
                     max(16 * 1024 * 1024, 4 * tile_bytes + (2 << 20)))

    out2d = pl.pallas_call(
        _relu_kernel,
        out_shape=jax.ShapeDtypeStruct(x2d.shape, x2d.dtype),
        grid=grid,
        in_specs=[pl.BlockSpec(block, index_map)],
        out_specs=pl.BlockSpec(block, index_map),
        input_output_aliases={0: 0},
        cost_estimate=cost,
        compiler_params=pltpu.CompilerParams(
            dimension_semantics=("parallel",),  # lets v7x's 2 TCs share the grid
            vmem_limit_bytes=vmem_limit,
        ),
    )(x2d)
    return out2d.reshape(orig_shape)


if __name__ == "__main__":
    # Donation warnings (if XLA ever declines the alias) are non-fatal noise.
    warnings.filterwarnings("ignore", message=".*donat.*")

    # Deterministic example input matching the module's expected shape
    # torch.Size([1, 336, 14, 14]) (already small).
    key = jax.random.PRNGKey(0)
    x = jax.random.normal(key, (1, 336, 14, 14), dtype=jnp.float32)

    # Reference + metadata captured BEFORE donation invalidates x's buffer.
    ref = jnp.maximum(x, 0.0)
    jax.block_until_ready(ref)
    in_shape, in_dtype = x.shape, x.dtype

    # Donate the input so input_output_aliases={0:0} actually runs in place.
    relu = jax.jit(relu_pallas, donate_argnums=0)
    y = relu(x)
    jax.block_until_ready(y)

    assert y.shape == in_shape and y.dtype == in_dtype
    assert bool(jnp.all(y == ref))

    print("KERNEL_OK")
</pallas_src>

<mosaic_0001>
module attributes {stable_mosaic.version = 11 : i64} {
  func.func @_relu_kernel(%arg0: memref<8x8232xf32, #tpu.memory_space<vmem>>, %arg1: memref<8x8232xf32, #tpu.memory_space<vmem>>) attributes {dimension_semantics = [], scalar_prefetch = 0 : i64, scratch_operands = 0 : i64, tpu.core_type = #tpu.core_type<tc>} {
    %c0 = arith.constant 0 : index
    %c0_0 = arith.constant 0 : index
    %0 = vector.load %arg0[%c0, %c0_0] : memref<8x8232xf32, #tpu.memory_space<vmem>>, vector<8x8232xf32>
    %cst = arith.constant 0.000000e+00 : f32
    %1 = vector.broadcast %cst : f32 to vector<8x8232xf32>
    %2 = arith.maximumf %0, %1 : vector<8x8232xf32>
    %c0_1 = arith.constant 0 : index
    %c0_2 = arith.constant 0 : index
    %3 = vector.load %arg1[%c0_1, %c0_2] : memref<8x8232xf32, #tpu.memory_space<vmem>>, vector<8x8232xf32>
    tpu.vector_store %arg1[%c0_1, %c0_2], %2 {strides = array<i32>} : memref<8x8232xf32, #tpu.memory_space<vmem>>, vector<8x8232xf32>,
    return
  }
}

</mosaic_0001>

<llo_original>
// kernel: relu_pallas.1
$region0: #{relu_pallas.1}
  #allocation0 [shape = 'u32[]', space=smem, size = 0x4, offset = 0x4, fixed_abs, tag = 'smem constant byte address 0x4 - core index']
  #allocation1 [shape = 'u32[144,128]{1,0:T(1,128)}', space=vmem, size = 0x12000, scoped, tag = 'internal scratch']
  %s0 = inlined_call_operand.vmem [shape: f32[8,8232], index: 0, kind: input, shape index: {}, may-alias: {0,1}]
  %s1 = inlined_call_operand.vmem [shape: f32[8,8232], index: 1, kind: output, shape index: {}, may-alias: {0,1}]
  %s2 = sld [smem:[#allocation0]]
  $region14: #{relu_pallas.1} parent=0
    _
  %s4 = ssub.s32 1, %s2
  %s5 = scalar_select 0, %s4, %s2
  // Predicated region
  $region2: #{relu_pallas.1} parent=0 // pred_check
    _
  $region3: #{relu_pallas.1} parent=0 // pred_check_branch
    %7 = sbr.rel (0) target = $region5
  $region4: #{relu_pallas.1} parent=0 // pred_region
    _
  $region5: #{relu_pallas.1} parent=0 // pred_fallthru
    _
  %v8 = vld [vmem:[%s0] sm:$0xff]
  %v9 = vld [vmem:[%s0 + $0x8] sm:$0xff]
  %v10 = vld [vmem:[%s0 + $0x10] sm:$0xff]
  %v11 = vld [vmem:[%s0 + $0x18] sm:$0xff]
  %v12 = vld [vmem:[%s0 + $0x20] sm:$0xff]
  %v13 = vld [vmem:[%s0 + $0x28] sm:$0xff]
  %v14 = vld [vmem:[%s0 + $0x30] sm:$0xff]
  %v15 = vld [vmem:[%s0 + $0x38] sm:$0xff]
  %v16 = vld [vmem:[%s0 + $0x40] sm:$0xff]
  %v17 = vld [vmem:[%s0 + $0x48] sm:$0xff]
  %v18 = vld [vmem:[%s0 + $0x50] sm:$0xff]
  %v19 = vld [vmem:[%s0 + $0x58] sm:$0xff]
  %v20 = vld [vmem:[%s0 + $0x60] sm:$0xff]
  %v21 = vld [vmem:[%s0 + $0x68] sm:$0xff]
  %v22 = vld [vmem:[%s0 + $0x70] sm:$0xff]
  %v23 = vld [vmem:[%s0 + $0x78] sm:$0xff]
  %v24 = vld [vmem:[%s0 + $0x80] sm:$0xff]
  %v25 = vld [vmem:[%s0 + $0x88] sm:$0xff]
  %v26 = vld [vmem:[%s0 + $0x90] sm:$0xff]
  %v27 = vld [vmem:[%s0 + $0x98] sm:$0xff]
  %v28 = vld [vmem:[%s0 + $0xa0] sm:$0xff]
  %v29 = vld [vmem:[%s0 + $0xa8] sm:$0xff]
  %v30 = vld [vmem:[%s0 + $0xb0] sm:$0xff]
  %v31 = vld [vmem:[%s0 + $0xb8] sm:$0xff]
  %v32 = vld [vmem:[%s0 + $0xc0] sm:$0xff]
  %v33 = vld [vmem:[%s0 + $0xc8] sm:$0xff]
  %v34 = vld [vmem:[%s0 + $0xd0] sm:$0xff]
  %v35 = vld [vmem:[%s0 + $0xd8] sm:$0xff]
  %v36 = vld [vmem:[%s0 + $0xe0] sm:$0xff]
  %v37 = vld [vmem:[%s0 + $0xe8] sm:$0xff]
  %v38 = vld [vmem:[%s0 + $0xf0] sm:$0xff]
  %v39 = vld [vmem:[%s0 + $0xf8] sm:$0xff]
  %v40 = vld [vmem:[%s0 + $0x100] sm:$0xff]
  %v41 = vld [vmem:[%s0 + $0x108] sm:$0xff]
  %v42 = vld [vmem:[%s0 + $0x110] sm:$0xff]
  %v43 = vld [vmem:[%s0 + $0x118] sm:$0xff]
  %v44 = vld [vmem:[%s0 + $0x120] sm:$0xff]
  %v45 = vld [vmem:[%s0 + $0x128] sm:$0xff]
  %v46 = vld [vmem:[%s0 + $0x130] sm:$0xff]
  %v47 = vld [vmem:[%s0 + $0x138] sm:$0xff]
  %v48 = vld [vmem:[%s0 + $0x140] sm:$0xff]
  %v49 = vld [vmem:[%s0 + $0x148] sm:$0xff]
  %v50 = vld [vmem:[%s0 + $0x150] sm:$0xff]
  %v51 = vld [vmem:[%s0 + $0x158] sm:$0xff]
  %v52 = vld [vmem:[%s0 + $0x160] sm:$0xff]
  %v53 = vld [vmem:[%s0 + $0x168] sm:$0xff]
  %v54 = vld [vmem:[%s0 + $0x170] sm:$0xff]
  %v55 = vld [vmem:[%s0 + $0x178] sm:$0xff]
  %v56 = vld [vmem:[%s0 + $0x180] sm:$0xff]
  %v57 = vld [vmem:[%s0 + $0x188] sm:$0xff]
  %v58 = vld [vmem:[%s0 + $0x190] sm:$0xff]
  %v59 = vld [vmem:[%s0 + $0x198] sm:$0xff]
  %v60 = vld [vmem:[%s0 + $0x1a0] sm:$0xff]
  %v61 = vld [vmem:[%s0 + $0x1a8] sm:$0xff]
  %v62 = vld [vmem:[%s0 + $0x1b0] sm:$0xff]
  %v63 = vld [vmem:[%s0 + $0x1b8] sm:$0xff]
  %v64 = vld [vmem:[%s0 + $0x1c0] sm:$0xff]
  %v65 = vld [vmem:[%s0 + $0x1c8] sm:$0xff]
  %v66 = vld [vmem:[%s0 + $0x1d0] sm:$0xff]
  %v67 = vld [vmem:[%s0 + $0x1d8] sm:$0xff]
  %v68 = vld [vmem:[%s0 + $0x1e0] sm:$0xff]
  %v69 = vld [vmem:[%s0 + $0x1e8] sm:$0xff]
  %v70 = vld [vmem:[%s0 + $0x1f0] sm:$0xff]
  %v71 = vld [vmem:[%s0 + $0x1f8] sm:$0xff]
  %v72 = vld [vmem:[%s0 + $0x200] sm:$0xff]
  %v73 = vmax.f32 %v8, 0.0
  %v74 = vmax.f32 %v9, 0.0
  %v75 = vmax.f32 %v10, 0.0
  %v76 = vmax.f32 %v11, 0.0
  %v77 = vmax.f32 %v12, 0.0
  %v78 = vmax.f32 %v13, 0.0
  %v79 = vmax.f32 %v14, 0.0
  %v80 = vmax.f32 %v15, 0.0
  %v81 = vmax.f32 %v16, 0.0
  %v82 = vmax.f32 %v17, 0.0
  %v83 = vmax.f32 %v18, 0.0
  %v84 = vmax.f32 %v19, 0.0
  %v85 = vmax.f32 %v20, 0.0
  %v86 = vmax.f32 %v21, 0.0
  %v87 = vmax.f32 %v22, 0.0
  %v88 = vmax.f32 %v23, 0.0
  %v89 = vmax.f32 %v24, 0.0
  %v90 = vmax.f32 %v25, 0.0
  %v91 = vmax.f32 %v26, 0.0
  %v92 = vmax.f32 %v27, 0.0
  %v93 = vmax.f32 %v28, 0.0
  %v94 = vmax.f32 %v29, 0.0
  %v95 = vmax.f32 %v30, 0.0
  %v96 = vmax.f32 %v31, 0.0
  %v97 = vmax.f32 %v32, 0.0
  %v98 = vmax.f32 %v33, 0.0
  %v99 = vmax.f32 %v34, 0.0
  %v100 = vmax.f32 %v35, 0.0
  %v101 = vmax.f32 %v36, 0.0
  %v102 = vmax.f32 %v37, 0.0
  %v103 = vmax.f32 %v38, 0.0
  %v104 = vmax.f32 %v39, 0.0
  %v105 = vmax.f32 %v40, 0.0
  %v106 = vmax.f32 %v41, 0.0
  %v107 = vmax.f32 %v42, 0.0
  %v108 = vmax.f32 %v43, 0.0
  %v109 = vmax.f32 %v44, 0.0
  %v110 = vmax.f32 %v45, 0.0
  %v111 = vmax.f32 %v46, 0.0
  %v112 = vmax.f32 %v47, 0.0
  %v113 = vmax.f32 %v48, 0.0
  %v114 = vmax.f32 %v49, 0.0
  %v115 = vmax.f32 %v50, 0.0
  %v116 = vmax.f32 %v51, 0.0
  %v117 = vmax.f32 %v52, 0.0
  %v118 = vmax.f32 %v53, 0.0
  %v119 = vmax.f32 %v54, 0.0
  %v120 = vmax.f32 %v55, 0.0
  %v121 = vmax.f32 %v56, 0.0
  %v122 = vmax.f32 %v57, 0.0
  %v123 = vmax.f32 %v58, 0.0
  %v124 = vmax.f32 %v59, 0.0
  %v125 = vmax.f32 %v60, 0.0
  %v126 = vmax.f32 %v61, 0.0
  %v127 = vmax.f32 %v62, 0.0
  %v128 = vmax.f32 %v63, 0.0
  %v129 = vmax.f32 %v64, 0.0
  %v130 = vmax.f32 %v65, 0.0
  %v131 = vmax.f32 %v66, 0.0
  %v132 = vmax.f32 %v67, 0.0
  %v133 = vmax.f32 %v68, 0.0
  %v134 = vmax.f32 %v69, 0.0
  %v135 = vmax.f32 %v70, 0.0
  %v136 = vmax.f32 %v71, 0.0
  %v137 = vmax.f32 %v72, 0.0
  %138 = vst [vmem:[%s1] sm:$0xff] %v73
  %139 = vst [vmem:[%s1 + $0x8] sm:$0xff] %v74
  %140 = vst [vmem:[%s1 + $0x10] sm:$0xff] %v75
  %141 = vst [vmem:[%s1 + $0x18] sm:$0xff] %v76
  %142 = vst [vmem:[%s1 + $0x20] sm:$0xff] %v77
  %143 = vst [vmem:[%s1 + $0x28] sm:$0xff] %v78
  %144 = vst [vmem:[%s1 + $0x30] sm:$0xff] %v79
  %145 = vst [vmem:[%s1 + $0x38] sm:$0xff] %v80
  %146 = vst [vmem:[%s1 + $0x40] sm:$0xff] %v81
  %147 = vst [vmem:[%s1 + $0x48] sm:$0xff] %v82
  %148 = vst [vmem:[%s1 + $0x50] sm:$0xff] %v83
  %149 = vst [vmem:[%s1 + $0x58] sm:$0xff] %v84
  %150 = vst [vmem:[%s1 + $0x60] sm:$0xff] %v85
  %151 = vst [vmem:[%s1 + $0x68] sm:$0xff] %v86
  %152 = vst [vmem:[%s1 + $0x70] sm:$0xff] %v87
  %153 = vst [vmem:[%s1 + $0x78] sm:$0xff] %v88
  %154 = vst [vmem:[%s1 + $0x80] sm:$0xff] %v89
  %155 = vst [vmem:[%s1 + $0x88] sm:$0xff] %v90
  %156 = vst [vmem:[%s1 + $0x90] sm:$0xff] %v91
  %157 = vst [vmem:[%s1 + $0x98] sm:$0xff] %v92
  %158 = vst [vmem:[%s1 + $0xa0] sm:$0xff] %v93
  %159 = vst [vmem:[%s1 + $0xa8] sm:$0xff] %v94
  %160 = vst [vmem:[%s1 + $0xb0] sm:$0xff] %v95
  %161 = vst [vmem:[%s1 + $0xb8] sm:$0xff] %v96
  %162 = vst [vmem:[%s1 + $0xc0] sm:$0xff] %v97
  %163 = vst [vmem:[%s1 + $0xc8] sm:$0xff] %v98
  %164 = vst [vmem:[%s1 + $0xd0] sm:$0xff] %v99
  %165 = vst [vmem:[%s1 + $0xd8] sm:$0xff] %v100
  %166 = vst [vmem:[%s1 + $0xe0] sm:$0xff] %v101
  %167 = vst [vmem:[%s1 + $0xe8] sm:$0xff] %v102
  %168 = vst [vmem:[%s1 + $0xf0] sm:$0xff] %v103
  %169 = vst [vmem:[%s1 + $0xf8] sm:$0xff] %v104
  %170 = vst [vmem:[%s1 + $0x100] sm:$0xff] %v105
  %171 = vst [vmem:[%s1 + $0x108] sm:$0xff] %v106
  %172 = vst [vmem:[%s1 + $0x110] sm:$0xff] %v107
  %173 = vst [vmem:[%s1 + $0x118] sm:$0xff] %v108
  %174 = vst [vmem:[%s1 + $0x120] sm:$0xff] %v109
  %175 = vst [vmem:[%s1 + $0x128] sm:$0xff] %v110
  %176 = vst [vmem:[%s1 + $0x130] sm:$0xff] %v111
  %177 = vst [vmem:[%s1 + $0x138] sm:$0xff] %v112
  %178 = vst [vmem:[%s1 + $0x140] sm:$0xff] %v113
  %179 = vst [vmem:[%s1 + $0x148] sm:$0xff] %v114
  %180 = vst [vmem:[%s1 + $0x150] sm:$0xff] %v115
  %181 = vst [vmem:[%s1 + $0x158] sm:$0xff] %v116
  %182 = vst [vmem:[%s1 + $0x160] sm:$0xff] %v117
  %183 = vst [vmem:[%s1 + $0x168] sm:$0xff] %v118
  %184 = vst [vmem:[%s1 + $0x170] sm:$0xff] %v119
  %185 = vst [vmem:[%s1 + $0x178] sm:$0xff] %v120
  %186 = vst [vmem:[%s1 + $0x180] sm:$0xff] %v121
  %187 = vst [vmem:[%s1 + $0x188] sm:$0xff] %v122
  %188 = vst [vmem:[%s1 + $0x190] sm:$0xff] %v123
  %189 = vst [vmem:[%s1 + $0x198] sm:$0xff] %v124
  %190 = vst [vmem:[%s1 + $0x1a0] sm:$0xff] %v125
  %191 = vst [vmem:[%s1 + $0x1a8] sm:$0xff] %v126
  %192 = vst [vmem:[%s1 + $0x1b0] sm:$0xff] %v127
  %193 = vst [vmem:[%s1 + $0x1b8] sm:$0xff] %v128
  %194 = vst [vmem:[%s1 + $0x1c0] sm:$0xff] %v129
  %195 = vst [vmem:[%s1 + $0x1c8] sm:$0xff] %v130
  %196 = vst [vmem:[%s1 + $0x1d0] sm:$0xff] %v131
  %197 = vst [vmem:[%s1 + $0x1d8] sm:$0xff] %v132
  %198 = vst [vmem:[%s1 + $0x1e0] sm:$0xff] %v133
  %199 = vst [vmem:[%s1 + $0x1e8] sm:$0xff] %v134
  %200 = vst [vmem:[%s1 + $0x1f0] sm:$0xff] %v135
  %201 = vst [vmem:[%s1 + $0x1f8] sm:$0xff] %v136
  %vm202 = vcmask 326656
  %203 = vst.msk [vmem:[%s1 + $0x200] sm:$0xff] %vm202, %v137
  // Predicated region
  $region6: #{relu_pallas.1} parent=0 // pred_check
    _
  $region7: #{relu_pallas.1} parent=0 // pred_check_branch
    %205 = sbr.rel (0) target = $region9
  $region8: #{relu_pallas.1} parent=0 // pred_region
    _
  $region9: #{relu_pallas.1} parent=0 // pred_fallthru
    _
  // Predicated region
  $region10: #{relu_pallas.1} parent=0 // pred_check
    _
  $region11: #{relu_pallas.1} parent=0 // pred_check_branch
    %207 = sbr.rel (0) target = $region13
  $region12: #{relu_pallas.1} parent=0 // pred_region
    _
  $region13: #{relu_pallas.1} parent=0 // pred_fallthru
    _

</llo_original>
